<compile_context>
chip_gen: v5e
topology: v5e:2x2
jax: 0.10.0
libtpu: 0.0.40
codegen_flags: <defaults>
</compile_context>

<pallas_src>
import math

import jax
import jax.numpy as jnp
from jax.experimental import pallas as pl
from jax.experimental.pallas import tpu as pltpu

IN_DIM = 64
HID_DIM = 50
HID_PAD = 128              # hidden dim padded to a full lane width
OUT_DIM = 64
PACK = 2                   # batch rows packed per lane-dense row
PACK_IN = PACK * IN_DIM    # 128
PACK_HID = PACK * HID_PAD  # 256
PACK_OUT = PACK * OUT_DIM  # 128
MAX_TILE_P = 2048          # packed rows per grid step (= 4096 batch rows)


def _round_up(n, m):
    return ((n + m - 1) // m) * m


def _batch_dim_semantics():
    """'parallel' everywhere; CORE_PARALLEL on v7x so both TCs split the batch."""
    try:
        kind = jax.devices()[0].device_kind.lower()
    except Exception:  # pragma: no cover - defensive, default backend is TPU
        kind = ""
    if "v7" in kind or "7x" in kind:
        return (pltpu.CORE_PARALLEL,)
    return ("parallel",)


def _q_network_kernel(x_ref, w1_ref, b1_ref, w2_ref, b2_ref, o_ref):
    # hidden: (tile_p, 128) @ (128, 256) -> f32 accumulate; bias + sigmoid in f32.
    x = x_ref[...].astype(jnp.bfloat16)
    h = jnp.dot(x, w1_ref[...], preferred_element_type=jnp.float32)
    h = jax.nn.sigmoid(h + b1_ref[...])              # logistic -> EUP path
    # output: (tile_p, 256) @ (256, 128) -> f32 accumulate; bias + sigmoid in f32.
    y = jnp.dot(h.astype(jnp.bfloat16), w2_ref[...],
                preferred_element_type=jnp.float32)
    o_ref[...] = jax.nn.sigmoid(y + b2_ref[...]).astype(o_ref.dtype)


def prepare_params(w1, b1, w2, b2):
    """One-time packing.  Inputs use PyTorch nn.Linear layout:
    w1: (50,64), b1: (50,), w2: (64,50), b2: (64,)."""
    w1_t = jnp.asarray(w1, jnp.float32).T            # (64, 50)
    w2_t = jnp.asarray(w2, jnp.float32).T            # (50, 64)

    # Pad hidden dim 50 -> 128 with zeros (math unchanged: padded w2 rows are 0).
    w1_p = jnp.zeros((IN_DIM, HID_PAD), jnp.float32).at[:, :HID_DIM].set(w1_t)
    b1_p = jnp.zeros((1, HID_PAD), jnp.float32).at[:, :HID_DIM].set(
        jnp.asarray(b1, jnp.float32).reshape(1, HID_DIM))
    w2_p = jnp.zeros((HID_PAD, OUT_DIM), jnp.float32).at[:HID_DIM, :].set(w2_t)
    b2_p = jnp.asarray(b2, jnp.float32).reshape(1, OUT_DIM)

    # Block-diagonal "packed-pair" weights: row i of the packed input holds
    # batch rows (2i, 2i+1), so blkdiag(w, w) applies w independently to each.
    eye = jnp.eye(PACK, dtype=jnp.float32)
    w1_blk = jnp.kron(eye, w1_p).astype(jnp.bfloat16)   # (128, 256) bf16
    w2_blk = jnp.kron(eye, w2_p).astype(jnp.bfloat16)   # (256, 128) bf16
    b1_blk = jnp.tile(b1_p, (1, PACK))                  # (1, 256) f32
    b2_blk = jnp.tile(b2_p, (1, PACK))                  # (1, 128) f32
    return w1_blk, b1_blk, w2_blk, b2_blk


def q_network_forward(x, packed_params):
    """x: (B, 64) f32; packed_params: output of prepare_params()."""
    w1_blk, b1_blk, w2_blk, b2_blk = packed_params
    B = x.shape[0]

    # Pad batch only to a multiple of 2*8 = 16 (so packed rows are a multiple
    # of 8) — no more whole-tile padding waste.
    b_pad = _round_up(max(B, 1), PACK * 8)
    if b_pad != B:
        x = jnp.pad(x, ((0, b_pad - B), (0, 0)))
    packed = b_pad // PACK
    x_pk = x.reshape(packed, PACK_IN)                  # free row-major view, 128-lane dense

    # Balance the tile size across blocks; last partial block wastes <= ~8 rows
    # of compute and no HBM traffic (Pallas clips edge-block DMAs/stores).
    num_blocks = pl.cdiv(packed, MAX_TILE_P)
    tile_p = _round_up(pl.cdiv(packed, num_blocks), 8)
    grid = (pl.cdiv(packed, tile_p),)

    out_pk = pl.pallas_call(
        _q_network_kernel,
        out_shape=jax.ShapeDtypeStruct((packed, PACK_OUT), jnp.float32),
        grid=grid,
        in_specs=[
            pl.BlockSpec((tile_p, PACK_IN), lambda i: (i, 0)),     # x: batch-tiled
            pl.BlockSpec((PACK_IN, PACK_HID), lambda i: (0, 0)),   # w1_blk: resident
            pl.BlockSpec((1, PACK_HID), lambda i: (0, 0)),         # b1_blk: resident
            pl.BlockSpec((PACK_HID, PACK_OUT), lambda i: (0, 0)),  # w2_blk: resident
            pl.BlockSpec((1, PACK_OUT), lambda i: (0, 0)),         # b2_blk: resident
        ],
        out_specs=pl.BlockSpec((tile_p, PACK_OUT), lambda i: (i, 0)),
        compiler_params=pltpu.CompilerParams(
            dimension_semantics=_batch_dim_semantics(),
            vmem_limit_bytes=32 * 1024 * 1024,   # headroom for big tiles on v5e
        ),
    )(x_pk, w1_blk, b1_blk, w2_blk, b2_blk)

    out = out_pk.reshape(b_pad, OUT_DIM)               # free view back to (B, 64)
    return out if b_pad == B else out[:B]


def init_params(key):
    """Deterministic PyTorch-style Linear init: U(-1/sqrt(fan_in), +1/sqrt(fan_in))."""
    k1, k2, k3, k4 = jax.random.split(key, 4)
    bound1 = 1.0 / math.sqrt(IN_DIM)
    bound2 = 1.0 / math.sqrt(HID_DIM)
    w1 = jax.random.uniform(k1, (HID_DIM, IN_DIM), jnp.float32, -bound1, bound1)
    b1 = jax.random.uniform(k2, (HID_DIM,), jnp.float32, -bound1, bound1)
    w2 = jax.random.uniform(k3, (OUT_DIM, HID_DIM), jnp.float32, -bound2, bound2)
    b2 = jax.random.uniform(k4, (OUT_DIM,), jnp.float32, -bound2, bound2)
    return w1, b1, w2, b2


def q_network_reference(x, w1, b1, w2, b2):
    h = jax.nn.sigmoid(x @ w1.T + b1)
    return jax.nn.sigmoid(h @ w2.T + b2)


if __name__ == "__main__":
    key = jax.random.PRNGKey(0)
    kx, kp = jax.random.split(key)

    batch = 8
    x = jax.random.normal(kx, (batch, IN_DIM), jnp.float32)
    params = init_params(kp)
    packed_params = prepare_params(*params)   # hoisted one-time packing / bf16 cast

    fwd = jax.jit(q_network_forward)
    out = jax.block_until_ready(fwd(x, packed_params))

    ref = q_network_reference(x, *params)
    assert out.shape == (batch, OUT_DIM)
    # bf16 matmul operands with f32 accumulation -> loose-ish tolerance.
    assert jnp.allclose(out, ref, atol=2e-2, rtol=0), "mismatch vs f32 reference"

    # Also exercise a batch that is not a multiple of 16 (ragged-tail path).
    x2 = jax.random.normal(jax.random.PRNGKey(1), (37, IN_DIM), jnp.float32)
    out2 = jax.block_until_ready(fwd(x2, packed_params))
    ref2 = q_network_reference(x2, *params)
    assert out2.shape == (37, OUT_DIM)
    assert jnp.allclose(out2, ref2, atol=2e-2, rtol=0), "mismatch vs reference (ragged batch)"

    print("KERNEL_OK")
</pallas_src>

<mosaic_0001>
module attributes {stable_mosaic.version = 11 : i64} {
  func.func @_q_network_kernel(%arg0: i32, %arg1: memref<8x128xf32, #tpu.memory_space<vmem>>, %arg2: memref<128x256xbf16, #tpu.memory_space<vmem>>, %arg3: memref<1x256xf32, #tpu.memory_space<vmem>>, %arg4: memref<256x128xbf16, #tpu.memory_space<vmem>>, %arg5: memref<1x128xf32, #tpu.memory_space<vmem>>, %arg6: memref<8x128xf32, #tpu.memory_space<vmem>>) attributes {dimension_semantics = [#tpu.dimension_semantics<parallel>], iteration_bounds = array<i64: 1>, scalar_prefetch = 0 : i64, scratch_operands = 0 : i64, tpu.core_type = #tpu.core_type<tc>, window_params = [{transform_indices = @transform_0, window_bounds = array<i64: 8, 128>}, {pipeline_mode = #tpu.pipeline_mode<synchronous>, transform_indices = @transform_1, window_bounds = array<i64: 128, 256>}, {pipeline_mode = #tpu.pipeline_mode<synchronous>, transform_indices = @transform_2, window_bounds = array<i64: 1, 256>}, {pipeline_mode = #tpu.pipeline_mode<synchronous>, transform_indices = @transform_3, window_bounds = array<i64: 256, 128>}, {pipeline_mode = #tpu.pipeline_mode<synchronous>, transform_indices = @transform_4, window_bounds = array<i64: 1, 128>}, {transform_indices = @transform_5, window_bounds = array<i64: 8, 128>}]} {
    %c0 = arith.constant 0 : index
    %c0_0 = arith.constant 0 : index
    %0 = vector.load %arg1[%c0, %c0_0] : memref<8x128xf32, #tpu.memory_space<vmem>>, vector<8x128xf32>
    %1 = arith.truncf %0 : vector<8x128xf32> to vector<8x128xbf16>
    %c0_1 = arith.constant 0 : index
    %c0_2 = arith.constant 0 : index
    %2 = vector.load %arg2[%c0_1, %c0_2] : memref<128x256xbf16, #tpu.memory_space<vmem>>, vector<128x256xbf16>
    %cst = arith.constant dense<0.000000e+00> : vector<8x256xf32>
    %3 = tpu.matmul %1, %2, %cst {dimension_numbers = #tpu.dot_dimension_numbers<[1], [0], [0], [1], [0, 0, 1, 1], [], []>} : vector<8x128xbf16>, vector<128x256xbf16>, vector<8x256xf32> -> vector<8x256xf32>
    %c0_3 = arith.constant 0 : index
    %c0_4 = arith.constant 0 : index
    %4 = vector.load %arg3[%c0_3, %c0_4] : memref<1x256xf32, #tpu.memory_space<vmem>>, vector<1x256xf32>
    %5 = vector.broadcast %4 : vector<1x256xf32> to vector<8x256xf32>
    %6 = arith.addf %3, %5 : vector<8x256xf32>
    %7 = arith.negf %6 : vector<8x256xf32>
    %8 = math.exp %7 : vector<8x256xf32>
    %cst_5 = arith.constant 1.000000e+00 : f32
    %9 = vector.broadcast %cst_5 : f32 to vector<8x256xf32>
    %10 = arith.addf %9, %8 : vector<8x256xf32>
    %11 = arith.divf %9, %10 : vector<8x256xf32>
    %12 = arith.truncf %11 : vector<8x256xf32> to vector<8x256xbf16>
    %c0_6 = arith.constant 0 : index
    %c0_7 = arith.constant 0 : index
    %13 = vector.load %arg4[%c0_6, %c0_7] : memref<256x128xbf16, #tpu.memory_space<vmem>>, vector<256x128xbf16>
    %cst_8 = arith.constant dense<0.000000e+00> : vector<8x128xf32>
    %14 = tpu.matmul %12, %13, %cst_8 {dimension_numbers = #tpu.dot_dimension_numbers<[1], [0], [0], [1], [0, 0, 1, 1], [], []>} : vector<8x256xbf16>, vector<256x128xbf16>, vector<8x128xf32> -> vector<8x128xf32>
    %c0_9 = arith.constant 0 : index
    %c0_10 = arith.constant 0 : index
    %15 = vector.load %arg5[%c0_9, %c0_10] : memref<1x128xf32, #tpu.memory_space<vmem>>, vector<1x128xf32>
    %16 = vector.broadcast %15 : vector<1x128xf32> to vector<8x128xf32>
    %17 = arith.addf %14, %16 : vector<8x128xf32>
    %18 = arith.negf %17 : vector<8x128xf32>
    %19 = math.exp %18 : vector<8x128xf32>
    %cst_11 = arith.constant 1.000000e+00 : f32
    %20 = vector.broadcast %cst_11 : f32 to vector<8x128xf32>
    %21 = arith.addf %20, %19 : vector<8x128xf32>
    %22 = arith.divf %20, %21 : vector<8x128xf32>
    %c0_12 = arith.constant 0 : index
    %c0_13 = arith.constant 0 : index
    %23 = vector.load %arg6[%c0_12, %c0_13] : memref<8x128xf32, #tpu.memory_space<vmem>>, vector<8x128xf32>
    tpu.vector_store %arg6[%c0_12, %c0_13], %22 {strides = array<i32>} : memref<8x128xf32, #tpu.memory_space<vmem>>, vector<8x128xf32>,
    return
  }
  func.func @transform_0(%arg0: i32) -> (i32, i32) {
    %c0_i32 = arith.constant 0 : i32
    %c0_i32_0 = arith.constant 0 : i32
    return %arg0, %c0_i32 : i32, i32
  }
  func.func @transform_1(%arg0: i32) -> (i32, i32) {
    %c0_i32 = arith.constant 0 : i32
    %c0_i32_0 = arith.constant 0 : i32
    %c0_i32_1 = arith.constant 0 : i32
    return %c0_i32, %c0_i32_0 : i32, i32
  }
  func.func @transform_2(%arg0: i32) -> (i32, i32) {
    %c0_i32 = arith.constant 0 : i32
    %c0_i32_0 = arith.constant 0 : i32
    %c0_i32_1 = arith.constant 0 : i32
    return %c0_i32, %c0_i32_0 : i32, i32
  }
  func.func @transform_3(%arg0: i32) -> (i32, i32) {
    %c0_i32 = arith.constant 0 : i32
    %c0_i32_0 = arith.constant 0 : i32
    %c0_i32_1 = arith.constant 0 : i32
    return %c0_i32, %c0_i32_0 : i32, i32
  }
  func.func @transform_4(%arg0: i32) -> (i32, i32) {
    %c0_i32 = arith.constant 0 : i32
    %c0_i32_0 = arith.constant 0 : i32
    %c0_i32_1 = arith.constant 0 : i32
    return %c0_i32, %c0_i32_0 : i32, i32
  }
  func.func @transform_5(%arg0: i32) -> (i32, i32) {
    %c0_i32 = arith.constant 0 : i32
    %c0_i32_0 = arith.constant 0 : i32
    return %arg0, %c0_i32 : i32, i32
  }
}

</mosaic_0001>

<llo_original>
// kernel: q_network_forward.1
$region0: #{q_network_forward.1}
  #allocation0 [shape = 'u32[]', space=smem, size = 0x4, offset = 0x4, fixed_abs, tag = 'smem constant byte address 0x4 - core index']
  #allocation1 [shape = 'u32[72,128]{1,0:T(1,128)}', space=vmem, size = 0x9000, scoped, tag = 'internal scratch']
  %s0 = inlined_call_operand.vmem [shape: f32[8,128], index: 0, kind: input, shape index: {}]
  %s1 = inlined_call_operand.hbm [shape: bf16[128,256], index: 1, kind: input, shape index: {}]
  %s2 = inlined_call_operand.vmem [shape: f32[1,256], index: 2, kind: input, shape index: {}]
  %s3 = inlined_call_operand.hbm [shape: bf16[256,128], index: 3, kind: input, shape index: {}]
  %s4 = inlined_call_operand.vmem [shape: f32[1,128], index: 4, kind: input, shape index: {}]
  %s5 = inlined_call_operand.vmem [shape: f32[8,128], index: 5, kind: output, shape index: {}]
  %s6 = sld [smem:[#allocation0]]
  $region38: #{q_network_forward.1} parent=0
    _
  %s8 = ssub.s32 1, %s6
  %s9 = scalar_select 0, %s8, %s6
  $region1: #{q_network_forward.1} parent=0
    #allocation2 [shape = 'u8[65536]{0}', space=vmem, size = 0x10000, scoped, tag = 'input window, operand 1, single buffered']
    #allocation3 [shape = 's32[1]{0}', space=sflag, size = 0x4, scoped, tag = 'scoped memory for q_network_forward.1']
    #allocation4 [shape = 'u8[65536]{0}', space=vmem, size = 0x10000, scoped, tag = 'input window, operand 3, single buffered']
    #allocation5 [shape = 's32[1]{0}', space=sflag, size = 0x4, scoped, tag = 'scoped memory for q_network_forward.1']
    %10 = vsyncpa [#allocation3], 0
    %11 = vsyncpa [#allocation5], 0
    // Predicated region
    $region2: #{q_network_forward.1} parent=1 // pred_check
      _
    $region3: #{q_network_forward.1} parent=1 // pred_check_branch
      %13 = sbr.rel (0) target = $region5
    $region4: #{q_network_forward.1} parent=1 // pred_region
      _
    $region5: #{q_network_forward.1} parent=1 // pred_fallthru
      _
    // Predicated region
    $region6: #{q_network_forward.1} parent=1 // pred_check
      _
    $region7: #{q_network_forward.1} parent=1 // pred_check_branch
      %15 = sbr.rel (0) target = $region9
    $region8: #{q_network_forward.1} parent=1 // pred_region
      %17 = vsyncadd [#allocation3], 0
      %s18 = sshll.u32 %s1, 4
      %s19 = int_to_ptr.hbm [resolvable:$true] %s18
      %s20 = sshll.u32 [#allocation2], 4
      %s21 = int_to_ptr.vmem [resolvable:$true] %s20
      %26 = dma.hbm_to_vmem [thread:$0]  %s19, 2048, %s21, [#allocation3], 128, 128, 8
    $region9: #{q_network_forward.1} parent=1 // pred_fallthru
      _
    // Predicated region
    $region10: #{q_network_forward.1} parent=1 // pred_check
      _
    $region11: #{q_network_forward.1} parent=1 // pred_check_branch
      %28 = sbr.rel (0) target = $region13
    $region12: #{q_network_forward.1} parent=1 // pred_region
      _
    $region13: #{q_network_forward.1} parent=1 // pred_fallthru
      _
    // Predicated region
    $region14: #{q_network_forward.1} parent=1 // pred_check
      _
    $region15: #{q_network_forward.1} parent=1 // pred_check_branch
      %30 = sbr.rel (0) target = $region17
    $region16: #{q_network_forward.1} parent=1 // pred_region
      %32 = vsyncadd [#allocation5], 0
      %s33 = sshll.u32 %s3, 4
      %s34 = int_to_ptr.hbm [resolvable:$true] %s33
      %s35 = sshll.u32 [#allocation4], 4
      %s36 = int_to_ptr.vmem [resolvable:$true] %s35
      %41 = dma.hbm_to_vmem [thread:$0]  %s34, 2048, %s36, [#allocation5], 64, 64, 4
    $region17: #{q_network_forward.1} parent=1 // pred_fallthru
      _
    // Predicated region
    $region18: #{q_network_forward.1} parent=1 // pred_check
      _
    $region19: #{q_network_forward.1} parent=1 // pred_check_branch
      %43 = sbr.rel (0) target = $region21
    $region20: #{q_network_forward.1} parent=1 // pred_region
      _
    $region21: #{q_network_forward.1} parent=1 // pred_fallthru
      _
    // Predicated region
    $region22: #{q_network_forward.1} parent=1 // pred_check
      _
    $region23: #{q_network_forward.1} parent=1 // pred_check_branch
      %45 = sbr.rel (0) target = $region25
    $region24: #{q_network_forward.1} parent=1 // pred_region
      %47 = dma.done [#allocation3], 2048
    $region25: #{q_network_forward.1} parent=1 // pred_fallthru
      _
    // Predicated region
    $region26: #{q_network_forward.1} parent=1 // pred_check
      _
    $region27: #{q_network_forward.1} parent=1 // pred_check_branch
      %49 = sbr.rel (0) target = $region29
    $region28: #{q_network_forward.1} parent=1 // pred_region
      %51 = dma.done [#allocation5], 2048
    $region29: #{q_network_forward.1} parent=1 // pred_fallthru
      _
    %v52 = vld [vmem:[%s0] sm:$0xff]
    %v53 = vpack.c.bf16 %v52, %v52
    %v54 = vld [vmem:[#allocation2] sm:$0xff]
    %v55 = vld [vmem:[#allocation2 + $0x8] sm:$0xff]
    %v56 = vld [vmem:[#allocation2 + $0x10] sm:$0xff]
    %v57 = vld [vmem:[#allocation2 + $0x18] sm:$0xff]
    %v58 = vld [vmem:[#allocation2 + $0x20] sm:$0xff]
    %v59 = vld [vmem:[#allocation2 + $0x28] sm:$0xff]
    %v60 = vld [vmem:[#allocation2 + $0x30] sm:$0xff]
    %v61 = vld [vmem:[#allocation2 + $0x38] sm:$0xff]
    %v62 = vld [vmem:[#allocation2 + $0x40] sm:$0xff]
    %v63 = vld [vmem:[#allocation2 + $0x48] sm:$0xff]
    %v64 = vld [vmem:[#allocation2 + $0x50] sm:$0xff]
    %v65 = vld [vmem:[#allocation2 + $0x58] sm:$0xff]
    %v66 = vld [vmem:[#allocation2 + $0x60] sm:$0xff]
    %v67 = vld [vmem:[#allocation2 + $0x68] sm:$0xff]
    %v68 = vld [vmem:[#allocation2 + $0x70] sm:$0xff]
    %v69 = vld [vmem:[#allocation2 + $0x78] sm:$0xff]
    %v70 = vld [vmem:[%s2] sm:$0x3]
    %v72 = vperm.slane %v70, 0
    %v73 = vperm.slane %v70, 1
    %v92 = vunpack.c.l.b16 %v54
    %v93 = vunpack.c.h.b16 %v54
    %v94 = vunpack.c.l.b16 %v55
    %v95 = vunpack.c.h.b16 %v55
    %v96 = vunpack.c.l.b16 %v56
    %v97 = vunpack.c.h.b16 %v56
    %v98 = vunpack.c.l.b16 %v57
    %v99 = vunpack.c.h.b16 %v57
    %v100 = vunpack.c.l.b16 %v58
    %v101 = vunpack.c.h.b16 %v58
    %v102 = vunpack.c.l.b16 %v59
    %v103 = vunpack.c.h.b16 %v59
    %v104 = vunpack.c.l.b16 %v60
    %v105 = vunpack.c.h.b16 %v60
    %v106 = vunpack.c.l.b16 %v61
    %v107 = vunpack.c.h.b16 %v61
    %v108 = vunpack.c.l.b16 %v62
    %v109 = vunpack.c.h.b16 %v62
    %v110 = vunpack.c.l.b16 %v63
    %v111 = vunpack.c.h.b16 %v63
    %v112 = vunpack.c.l.b16 %v64
    %v113 = vunpack.c.h.b16 %v64
    %v114 = vunpack.c.l.b16 %v65
    %v115 = vunpack.c.h.b16 %v65
    %v116 = vunpack.c.l.b16 %v66
    %v117 = vunpack.c.h.b16 %v66
    %v118 = vunpack.c.l.b16 %v67
    %v119 = vunpack.c.h.b16 %v67
    %v120 = vunpack.c.l.b16 %v68
    %v121 = vunpack.c.h.b16 %v68
    %v122 = vunpack.c.l.b16 %v69
    %v123 = vunpack.c.h.b16 %v69
    %v124 = vpack.c.b16 %v94, %v92
    %v125 = vpack.c.b16 %v95, %v93
    %v126 = vpack.c.b16 %v98, %v96
    %v127 = vpack.c.b16 %v99, %v97
    %v128 = vpack.c.b16 %v102, %v100
    %v129 = vpack.c.b16 %v103, %v101
    %v130 = vpack.c.b16 %v106, %v104
    %v131 = vpack.c.b16 %v107, %v105
    %v132 = vpack.c.b16 %v110, %v108
    %v133 = vpack.c.b16 %v111, %v109
    %v134 = vpack.c.b16 %v114, %v112
    %v135 = vpack.c.b16 %v115, %v113
    %v136 = vpack.c.b16 %v118, %v116
    %v137 = vpack.c.b16 %v119, %v117
    %v138 = vpack.c.b16 %v122, %v120
    %v139 = vpack.c.b16 %v123, %v121
    %156 = vmatpush.bf16.msra.mxu0 %v138
    %157 = vmatpush.bf16.msra.mxu0 %v136
    %158 = vmatpush.bf16.msra.mxu0 %v134
    %159 = vmatpush.bf16.msra.mxu0 %v132
    %160 = vmatpush.bf16.msra.mxu0 %v130
    %161 = vmatpush.bf16.msra.mxu0 %v128
    %162 = vmatpush.bf16.msra.mxu0 %v126
    %163 = vmatpush.bf16.msra.mxu0 %v124
    %164 = vmatmul.bf16.gmra.mxu0 %v53
    %v165 = vpop.f32.mrf.mxu0
    %v166 = vadd.f32 %v72, %v165
    %v167 = vpop.f32.mrf.mxu0
    %168 = vdwg.mxu0
    %169 = vmatpush.bf16.msra.mxu0 %v139
    %170 = vmatpush.bf16.msra.mxu0 %v137
    %171 = vmatpush.bf16.msra.mxu0 %v135
    %172 = vmatpush.bf16.msra.mxu0 %v133
    %173 = vmatpush.bf16.msra.mxu0 %v131
    %174 = vmatpush.bf16.msra.mxu0 %v129
    %175 = vmatpush.bf16.msra.mxu0 %v127
    %176 = vmatpush.bf16.msra.mxu0 %v125
    %177 = vmatmul.bf16.gmra.mxu0 %v53
    %v178 = vpop.f32.mrf.mxu0
    %v179 = vadd.f32 %v73, %v178
    %v180 = vpop.f32.mrf.mxu0
    %181 = vdwg.mxu0
    %v182 = vxor.u32 %v166, 2147483648
    %v183 = vxor.u32 %v179, 2147483648
    %v184 = vmul.f32 %v182, 1.442695
    %v185 = vpow.pop %v184
    %v186 = vmul.f32 %v183, 1.442695
    %v187 = vpow.pop %v186
    %v188 = vadd.f32 %v185, 1.0
    %v189 = vadd.f32 %v187, 1.0
    %v190 = vrcp.pop %v188
    %v191 = vmul.f32 %v188, %v190
    %v192 = vsub.f32 1.0, %v191
    %v193 = vmul.f32 %v190, %v192
    %v194 = vadd.f32 %v190, %v193
    %vm195 = vweird.f32 %v188
    %vm196 = vweird.f32 %v190
    %vm197 = vmor %vm195, %vm196
    %v198 = vsel %vm197, %v190, %v194
    %v199 = vand.u32 2147483647, %v188
    %vm200 = vcmp.eq.f32.partialorder %v199, 8.507059e+37
    %v201 = vand.u32 %v188, 2147483648
    %v202 = vor.u32 1.1754944e-38, %v201
    %v203 = vsel %vm200, %v202, %v198
    %v204 = vmul.f32 1.0, %v203
    %v205 = vrcp.pop %v189
    %v206 = vmul.f32 %v189, %v205
    %v207 = vsub.f32 1.0, %v206
    %v208 = vmul.f32 %v205, %v207
    %v209 = vadd.f32 %v205, %v208
    %vm210 = vweird.f32 %v189
    %vm211 = vweird.f32 %v205
    %vm212 = vmor %vm210, %vm211
    %v213 = vsel %vm212, %v205, %v209
    %v214 = vand.u32 2147483647, %v189
    %vm215 = vcmp.eq.f32.partialorder %v214, 8.507059e+37
    %v216 = vand.u32 %v189, 2147483648
    %v217 = vor.u32 1.1754944e-38, %v216
    %v218 = vsel %vm215, %v217, %v213
    %v219 = vmul.f32 1.0, %v218
    %v220 = vpack.c.bf16 %v204, %v204
    %v221 = vpack.c.bf16 %v219, %v219
    %v222 = vld [vmem:[#allocation4] sm:$0xf]
    %v223 = vld [vmem:[#allocation4 + $0x4] sm:$0xf]
    %v224 = vld [vmem:[#allocation4 + $0x8] sm:$0xf]
    %v225 = vld [vmem:[#allocation4 + $0xc] sm:$0xf]
    %v226 = vld [vmem:[#allocation4 + $0x10] sm:$0xf]
    %v227 = vld [vmem:[#allocation4 + $0x14] sm:$0xf]
    %v228 = vld [vmem:[#allocation4 + $0x18] sm:$0xf]
    %v229 = vld [vmem:[#allocation4 + $0x1c] sm:$0xf]
    %v230 = vld [vmem:[#allocation4 + $0x20] sm:$0xf]
    %v231 = vld [vmem:[#allocation4 + $0x24] sm:$0xf]
    %v232 = vld [vmem:[#allocation4 + $0x28] sm:$0xf]
    %v233 = vld [vmem:[#allocation4 + $0x2c] sm:$0xf]
    %v234 = vld [vmem:[#allocation4 + $0x30] sm:$0xf]
    %v235 = vld [vmem:[#allocation4 + $0x34] sm:$0xf]
    %v236 = vld [vmem:[#allocation4 + $0x38] sm:$0xf]
    %v237 = vld [vmem:[#allocation4 + $0x3c] sm:$0xf]
    %v238 = vld [vmem:[#allocation4 + $0x40] sm:$0xf]
    %v239 = vld [vmem:[#allocation4 + $0x44] sm:$0xf]
    %v240 = vld [vmem:[#allocation4 + $0x48] sm:$0xf]
    %v241 = vld [vmem:[#allocation4 + $0x4c] sm:$0xf]
    %v242 = vld [vmem:[#allocation4 + $0x50] sm:$0xf]
    %v243 = vld [vmem:[#allocation4 + $0x54] sm:$0xf]
    %v244 = vld [vmem:[#allocation4 + $0x58] sm:$0xf]
    %v245 = vld [vmem:[#allocation4 + $0x5c] sm:$0xf]
    %v246 = vld [vmem:[#allocation4 + $0x60] sm:$0xf]
    %v247 = vld [vmem:[#allocation4 + $0x64] sm:$0xf]
    %v248 = vld [vmem:[#allocation4 + $0x68] sm:$0xf]
    %v249 = vld [vmem:[#allocation4 + $0x6c] sm:$0xf]
    %v250 = vld [vmem:[#allocation4 + $0x70] sm:$0xf]
    %v251 = vld [vmem:[#allocation4 + $0x74] sm:$0xf]
    %v252 = vld [vmem:[#allocation4 + $0x78] sm:$0xf]
    %v253 = vld [vmem:[#allocation4 + $0x7c] sm:$0xf]
    %v254 = vld [vmem:[%s4] sm:$0x1]
    %v256 = vperm.slane %v254, 0
    %v290 = vunpack.c.l.b16 %v222
    %v291 = vunpack.c.l.b16 %v223
    %v292 = vunpack.c.l.b16 %v224
    %v293 = vunpack.c.l.b16 %v225
    %v294 = vunpack.c.l.b16 %v226
    %v295 = vunpack.c.l.b16 %v227
    %v296 = vunpack.c.l.b16 %v228
    %v297 = vunpack.c.l.b16 %v229
    %v298 = vunpack.c.l.b16 %v230
    %v299 = vunpack.c.l.b16 %v231
    %v300 = vunpack.c.l.b16 %v232
    %v301 = vunpack.c.l.b16 %v233
    %v302 = vunpack.c.l.b16 %v234
    %v303 = vunpack.c.l.b16 %v235
    %v304 = vunpack.c.l.b16 %v236
    %v305 = vunpack.c.l.b16 %v237
    %v306 = vunpack.c.l.b16 %v238
    %v307 = vunpack.c.l.b16 %v239
    %v308 = vunpack.c.l.b16 %v240
    %v309 = vunpack.c.l.b16 %v241
    %v310 = vunpack.c.l.b16 %v242
    %v311 = vunpack.c.l.b16 %v243
    %v312 = vunpack.c.l.b16 %v244
    %v313 = vunpack.c.l.b16 %v245
    %v314 = vunpack.c.l.b16 %v246
    %v315 = vunpack.c.l.b16 %v247
    %v316 = vunpack.c.l.b16 %v248
    %v317 = vunpack.c.l.b16 %v249
    %v318 = vunpack.c.l.b16 %v250
    %v319 = vunpack.c.l.b16 %v251
    %v320 = vunpack.c.l.b16 %v252
    %v321 = vunpack.c.l.b16 %v253
    %v322 = vpack.c.b16 %v291, %v290
    %v323 = vpack.c.b16 %v293, %v292
    %v324 = vpack.c.b16 %v295, %v294
    %v325 = vpack.c.b16 %v297, %v296
    %v326 = vpack.c.b16 %v299, %v298
    %v327 = vpack.c.b16 %v301, %v300
    %v328 = vpack.c.b16 %v303, %v302
    %v329 = vpack.c.b16 %v305, %v304
    %v330 = vpack.c.b16 %v307, %v306
    %v331 = vpack.c.b16 %v309, %v308
    %v332 = vpack.c.b16 %v311, %v310
    %v333 = vpack.c.b16 %v313, %v312
    %v334 = vpack.c.b16 %v315, %v314
    %v335 = vpack.c.b16 %v317, %v316
    %v336 = vpack.c.b16 %v319, %v318
    %v337 = vpack.c.b16 %v321, %v320
    %354 = vmatpush.bf16.msra.mxu0 %v329
    %355 = vmatpush.bf16.msra.mxu0 %v328
    %356 = vmatpush.bf16.msra.mxu0 %v327
    %357 = vmatpush.bf16.msra.mxu0 %v326
    %358 = vmatpush.bf16.msra.mxu0 %v325
    %359 = vmatpush.bf16.msra.mxu0 %v324
    %360 = vmatpush.bf16.msra.mxu0 %v323
    %361 = vmatpush.bf16.msra.mxu0 %v322
    %362 = vmatmul.bf16.gmra.mxu0 %v220
    %v363 = vpop.f32.mrf.mxu0
    %v364 = vadd.f32 %v256, %v363
    %v365 = vpop.f32.mrf.mxu0
    %366 = vdwg.mxu0
    %367 = vmatpush.bf16.msra.mxu0 %v337
    %368 = vmatpush.bf16.msra.mxu0 %v336
    %369 = vmatpush.bf16.msra.mxu0 %v335
    %370 = vmatpush.bf16.msra.mxu0 %v334
    %371 = vmatpush.bf16.msra.mxu0 %v333
    %372 = vmatpush.bf16.msra.mxu0 %v332
    %373 = vmatpush.bf16.msra.mxu0 %v331
    %374 = vmatpush.bf16.msra.mxu0 %v330
    %375 = vmatmul.bf16.gmra.mxu0 %v221
    %v376 = vpop.f32.mrf.mxu0
    %v377 = vadd.f32 %v364, %v376
    %v378 = vpop.f32.mrf.mxu0
    %379 = vdwg.mxu0
    %v380 = vxor.u32 %v377, 2147483648
    %v381 = vmul.f32 %v380, 1.442695
    %v382 = vpow.pop %v381
    %v383 = vadd.f32 %v382, 1.0
    %v384 = vrcp.pop %v383
    %v385 = vmul.f32 %v383, %v384
    %v386 = vsub.f32 1.0, %v385
    %v387 = vmul.f32 %v384, %v386
    %v388 = vadd.f32 %v384, %v387
    %vm389 = vweird.f32 %v383
    %vm390 = vweird.f32 %v384
    %vm391 = vmor %vm389, %vm390
    %v392 = vsel %vm391, %v384, %v388
    %v393 = vand.u32 2147483647, %v383
    %vm394 = vcmp.eq.f32.partialorder %v393, 8.507059e+37
    %v395 = vand.u32 %v383, 2147483648
    %v396 = vor.u32 1.1754944e-38, %v395
    %v397 = vsel %vm394, %v396, %v392
    %v398 = vmul.f32 1.0, %v397
    %399 = vst [vmem:[%s5] sm:$0xff] %v398
    // Predicated region
    $region30: #{q_network_forward.1} parent=1 // pred_check
      _
    $region31: #{q_network_forward.1} parent=1 // pred_check_branch
      %401 = sbr.rel (0) target = $region33
    $region32: #{q_network_forward.1} parent=1 // pred_region
      _
    $region33: #{q_network_forward.1} parent=1 // pred_fallthru
      _
    // Predicated region
    $region34: #{q_network_forward.1} parent=1 // pred_check
      _
    $region35: #{q_network_forward.1} parent=1 // pred_check_branch
      %403 = sbr.rel (0) target = $region37
    $region36: #{q_network_forward.1} parent=1 // pred_region
      _
    $region37: #{q_network_forward.1} parent=1 // pred_fallthru
      _
    %404 = vsyncpa [#allocation3], 1
    %405 = vsyncpa [#allocation5], 1

</llo_original>
